<compile_context>
chip_gen: v6e
topology: v6e:2x2x1
jax: 0.10.0
libtpu: 0.0.40
codegen_flags: <defaults>
</compile_context>

<pallas_src>
import functools

import numpy as np
import jax
import jax.numpy as jnp
from jax.experimental import pallas as pl
from jax.experimental.pallas import tpu as pltpu


# ----------------------------- Pallas kernels -------------------------------

def _mask_blend_kernel(x_ref, m_ref, b_ref, o_ref):
    # x_ref/o_ref: (block_m, block_hw); m_ref/b_ref: (1, block_hw) f32 rows
    # broadcast over the n*c rows.  blend b = offset*(1-mask) is precomputed,
    # so the body is a single fused multiply-add on full 128-lane vregs.
    x = x_ref[...].astype(jnp.float32)
    o_ref[...] = (x * m_ref[...] + b_ref[...]).astype(o_ref.dtype)


def _mask_only_kernel(x_ref, m_ref, o_ref):
    x = x_ref[...].astype(jnp.float32)
    o_ref[...] = (x * m_ref[...]).astype(o_ref.dtype)


# -------------------------------- tiling -------------------------------------

def _round_up(v, m):
    return -(-v // m) * m


def _vmem_capacity_bytes():
    """Per-core VMEM capacity; conservative 64 MiB (v7x) fallback."""
    try:
        info = pltpu.get_tpu_info()
        for attr in ("vmem_capacity_bytes", "vmem_size_bytes", "vmem_bytes"):
            cap = getattr(info, attr, None)
            if cap:
                return int(cap)
    except Exception:
        pass
    return 64 << 20


def _choose_blocks(N, HW, itemsize, target_bytes):
    """Pick (block_m, block_hw): (8,128)-legal, ~target_bytes AFTER sublane padding."""
    sub = max(8, 32 // itemsize)   # packed sublane granularity: 8 f32 / 16 bf16 / 32 i8

    # Rows: take all N rows (N = n*c is small for GridMask).  The broadcast
    # mask/blend rows are then fetched once per HW tile, never per grid step.
    block_m = N
    rows_eff = _round_up(N, sub)   # VMEM-padded rows actually resident

    # Lanes: budget so padded rows x lanes ~ target_bytes, in 128-lane steps.
    # A ragged final lane block is fine (cdiv grid, masked store).
    lanes = max(128, (target_bytes // (rows_eff * itemsize)) // 128 * 128)
    if lanes >= HW:
        block_hw = HW
        # Prefer >= 2 HW tiles (megacore sharding + fetch/compute/writeback
        # overlap) as long as splitting still yields full 128-lane blocks.
        if HW >= 2 * 128:
            half = _round_up(-(-HW // 2), 128)
            if half < HW:
                block_hw = half
    else:
        block_hw = lanes

    # Huge-N fallback: if all rows at the minimum 128-lane width still blow
    # the budget, split the row axis too (the HW-slow grid order keeps the
    # broadcast rows resident across the fast N axis).
    if _round_up(block_m, sub) * block_hw * itemsize > 2 * target_bytes and N > sub:
        rows = max(1, (2 * target_bytes) // (block_hw * itemsize))
        block_m = min(N, max(sub, rows // sub * sub))

    return block_m, block_hw


# --------------------------- pallas_call wrapper -----------------------------

def _apply(x, mask, blend):
    """x: (n, c, h, w); mask: (h, w) f32; blend: (h, w) f32 or None."""
    n, c, h, w = x.shape
    N, HW = n * c, h * w
    dtype = x.dtype
    itemsize = jnp.dtype(dtype).itemsize

    xf = x.reshape(N, HW)
    m_row = mask.astype(jnp.float32).reshape(1, HW)
    operands = [xf, m_row]
    if blend is not None:
        operands.append(blend.astype(jnp.float32).reshape(1, HW))

    vmem_cap = _vmem_capacity_bytes()
    target = max(1 << 20, vmem_cap // 32)   # ~4 MiB on 128 MiB VMEM, ~2 MiB on v7x
    block_m, block_hw = _choose_blocks(N, HW, itemsize, target)

    num_hw = -(-HW // block_hw)
    num_n = -(-N // block_m)
    # HW tile index on the SLOW axis: the (0, j) broadcast-row blocks are then
    # unchanged across the fast N axis and Pallas skips the re-DMA.
    grid = (num_hw, num_n)

    x_spec = pl.BlockSpec((block_m, block_hw), lambda j, i: (i, j))
    row_spec = pl.BlockSpec((1, block_hw), lambda j, i: (0, j))
    if blend is not None:
        in_specs = [x_spec, row_spec, row_spec]
        kernel = _mask_blend_kernel
    else:
        in_specs = [x_spec, row_spec]
        kernel = _mask_only_kernel

    # VMEM budget: x + out blocks double-buffered, plus the 1-row broadcast
    # blocks (which pad to 8 f32 sublanes per buffer), plus compiler headroom.
    sub = max(8, 32 // itemsize)
    block_bytes = _round_up(block_m, sub) * _round_up(block_hw, 128) * itemsize
    row_bytes = 8 * _round_up(block_hw, 128) * 4
    n_rows = 2 if blend is not None else 1
    needed = 4 * block_bytes + 2 * n_rows * row_bytes + (2 << 20)
    vmem_limit = int(max(needed, min(32 << 20, vmem_cap // 2)))

    out = pl.pallas_call(
        kernel,
        out_shape=jax.ShapeDtypeStruct((N, HW), dtype),
        grid=grid,
        in_specs=in_specs,
        out_specs=x_spec,
        input_output_aliases={0: 0},   # real in-place write under jit donation
        compiler_params=pltpu.CompilerParams(
            dimension_semantics=("parallel", "parallel"),
            vmem_limit_bytes=vmem_limit),
    )(*operands)

    return out.reshape(n, c, h, w)


@functools.partial(jax.jit, donate_argnums=(0,))
def _apply_mask_only(x, mask):
    return _apply(x, mask, None)


@functools.partial(jax.jit, donate_argnums=(0,))
def _apply_mask_offset(x, mask, offset):
    blend = offset.astype(jnp.float32) * (1.0 - mask.astype(jnp.float32))
    return _apply(x, mask, blend)


def gridmask_apply(x, mask, offset=None):
    """Apply GridMask blend: x*mask (+ offset*(1-mask)).  x is donated."""
    if offset is None:
        return _apply_mask_only(x, mask)
    return _apply_mask_offset(x, mask, offset)


# ------------------------- host-side mask construction -----------------------

def build_gridmask(h, w, *, use_h, use_w, rotate, ratio, mode, rng):
    """Replicates the NumPy/PIL mask construction of GridMask.forward."""
    hh = int(1.5 * h)
    ww = int(1.5 * w)
    d = rng.randint(2, h)
    length = min(max(int(d * ratio + 0.5), 1), d - 1)
    mask = np.ones((hh, ww), np.float32)
    st_h = rng.randint(d)
    st_w = rng.randint(d)
    if use_h:
        for i in range(hh // d):
            s = d * i + st_h
            t = min(s + length, hh)
            mask[s:t, :] *= 0
    if use_w:
        for i in range(ww // d):
            s = d * i + st_w
            t = min(s + length, ww)
            mask[:, s:t] *= 0
    r = rng.randint(rotate)
    # TODO(synk): PIL Image.rotate(r) for rotate>1 has no clean Pallas/JAX
    # equivalent; with the default rotate=1, r==0 and rotation is identity.
    assert r == 0, "only rotate=1 (identity rotation) is supported here"
    mask = mask[(hh - h) // 2:(hh - h) // 2 + h,
                (ww - w) // 2:(ww - w) // 2 + w]
    mask = mask.astype(np.float32)
    if mode == 1:
        mask = 1.0 - mask
    return mask


def gridmask_forward(x, *, use_h=True, use_w=True, rotate=1, offset=False,
                     ratio=0.5, mode=0, prob=1.0, training=True, seed=0):
    """Full GridMask forward. x: (n, c, h, w) jnp array (donated on the masked path)."""
    rng = np.random.RandomState(seed)
    if rng.rand() > prob or not training:
        return x
    n, c, h, w = x.shape
    mask = jnp.asarray(build_gridmask(h, w, use_h=use_h, use_w=use_w,
                                      rotate=rotate, ratio=ratio, mode=mode,
                                      rng=rng))
    off = None
    if offset:
        off = jnp.asarray((2.0 * (rng.rand(h, w) - 0.5)).astype(np.float32))
    return gridmask_apply(x, mask, off)


# ----------------------------------- main ------------------------------------

if __name__ == "__main__":
    key = jax.random.PRNGKey(0)
    n, c, h, w = 2, 4, 16, 16
    x = jax.random.normal(key, (n, c, h, w), dtype=jnp.float32)
    # Snapshot x before the kernel: x is donated (its buffer is reused).
    x_np = np.asarray(x).copy()
    seed = 0

    # offset=True exercises the full blend path: x*mask + offset*(1-mask)
    out = gridmask_forward(x, use_h=True, use_w=True, rotate=1, offset=True,
                           ratio=0.5, mode=0, prob=1.0, training=True,
                           seed=seed)
    out = jax.block_until_ready(out)

    # offset=False exercises the 2-operand mask-only kernel (default config).
    x2 = jnp.asarray(x_np)
    out2 = gridmask_forward(x2, use_h=True, use_w=True, rotate=1, offset=False,
                            ratio=0.5, mode=0, prob=1.0, training=True,
                            seed=seed)
    out2 = jax.block_until_ready(out2)

    # Reference check in plain NumPy (same deterministic mask / offset draws).
    rng = np.random.RandomState(seed)
    _ = rng.rand()  # prob gate draw
    mask_np = build_gridmask(h, w, use_h=True, use_w=True, rotate=1,
                             ratio=0.5, mode=0, rng=rng)
    off_np = (2.0 * (rng.rand(h, w) - 0.5)).astype(np.float32)
    ref = (x_np.reshape(-1, h, w) * mask_np
           + off_np * (1.0 - mask_np)).reshape(n, c, h, w)
    np.testing.assert_allclose(np.asarray(out), ref, rtol=1e-6, atol=1e-6)

    ref2 = (x_np.reshape(-1, h, w) * mask_np).reshape(n, c, h, w)
    np.testing.assert_allclose(np.asarray(out2), ref2, rtol=1e-6, atol=1e-6)

    print("KERNEL_OK")
</pallas_src>

<mosaic_0001>
module attributes {stable_mosaic.version = 11 : i64} {
  func.func @_mask_blend_kernel(%arg0: i32, %arg1: i32, %arg2: memref<8x128xf32, #tpu.memory_space<vmem>>, %arg3: memref<1x128xf32, #tpu.memory_space<vmem>>, %arg4: memref<1x128xf32, #tpu.memory_space<vmem>>, %arg5: memref<8x128xf32, #tpu.memory_space<vmem>>) attributes {dimension_semantics = [#tpu.dimension_semantics<parallel>, #tpu.dimension_semantics<parallel>], iteration_bounds = array<i64: 2, 1>, scalar_prefetch = 0 : i64, scratch_operands = 0 : i64, tpu.core_type = #tpu.core_type<tc>, window_params = [{transform_indices = @transform_0, window_bounds = array<i64: 8, 128>}, {transform_indices = @transform_1, window_bounds = array<i64: 1, 128>}, {transform_indices = @transform_2, window_bounds = array<i64: 1, 128>}, {transform_indices = @transform_3, window_bounds = array<i64: 8, 128>}]} {
    %c0 = arith.constant 0 : index
    %c0_0 = arith.constant 0 : index
    %0 = vector.load %arg2[%c0, %c0_0] : memref<8x128xf32, #tpu.memory_space<vmem>>, vector<8x128xf32>
    %c0_1 = arith.constant 0 : index
    %c0_2 = arith.constant 0 : index
    %1 = vector.load %arg3[%c0_1, %c0_2] : memref<1x128xf32, #tpu.memory_space<vmem>>, vector<1x128xf32>
    %2 = vector.broadcast %1 : vector<1x128xf32> to vector<8x128xf32>
    %3 = arith.mulf %0, %2 : vector<8x128xf32>
    %c0_3 = arith.constant 0 : index
    %c0_4 = arith.constant 0 : index
    %4 = vector.load %arg4[%c0_3, %c0_4] : memref<1x128xf32, #tpu.memory_space<vmem>>, vector<1x128xf32>
    %5 = vector.broadcast %4 : vector<1x128xf32> to vector<8x128xf32>
    %6 = arith.addf %3, %5 : vector<8x128xf32>
    %c0_5 = arith.constant 0 : index
    %c0_6 = arith.constant 0 : index
    %7 = vector.load %arg5[%c0_5, %c0_6] : memref<8x128xf32, #tpu.memory_space<vmem>>, vector<8x128xf32>
    tpu.vector_store %arg5[%c0_5, %c0_6], %6 {strides = array<i32>} : memref<8x128xf32, #tpu.memory_space<vmem>>, vector<8x128xf32>,
    return
  }
  func.func @transform_0(%arg0: i32, %arg1: i32) -> (i32, i32) {
    %c0_i32 = arith.constant 0 : i32
    return %arg1, %arg0 : i32, i32
  }
  func.func @transform_1(%arg0: i32, %arg1: i32) -> (i32, i32) {
    %c0_i32 = arith.constant 0 : i32
    %c0_i32_0 = arith.constant 0 : i32
    return %c0_i32, %arg0 : i32, i32
  }
  func.func @transform_2(%arg0: i32, %arg1: i32) -> (i32, i32) {
    %c0_i32 = arith.constant 0 : i32
    %c0_i32_0 = arith.constant 0 : i32
    return %c0_i32, %arg0 : i32, i32
  }
  func.func @transform_3(%arg0: i32, %arg1: i32) -> (i32, i32) {
    %c0_i32 = arith.constant 0 : i32
    return %arg1, %arg0 : i32, i32
  }
}

</mosaic_0001>

<llo_original>
// kernel: _apply_mask_offset.1
$region0: #{_apply_mask_offset.1}
  #allocation0 [shape = 'u32[]', space=smem, size = 0x4, offset = 0x4, fixed_abs, tag = 'smem constant byte address 0x4 - core index']
  #allocation1 [shape = 'u32[144,128]{1,0:T(1,128)}', space=vmem, size = 0x12000, scoped, tag = 'internal scratch']
  %s0 = inlined_call_operand.vmem [shape: f32[8,256], index: 0, kind: input, shape index: {}, may-alias: {0,3}]
  %s1 = inlined_call_operand.vmem [shape: f32[1,256], index: 1, kind: input, shape index: {}]
  %s2 = inlined_call_operand.vmem [shape: f32[1,256], index: 2, kind: input, shape index: {}]
  %s3 = inlined_call_operand.vmem [shape: f32[8,256], index: 3, kind: output, shape index: {}, may-alias: {0,3}]
  %s4 = sld [smem:[#allocation0]]
  $region45: #{_apply_mask_offset.1} parent=0
    _
  %s6 = ssub.s32 1, %s4
  %s7 = scalar_select 0, %s6, %s4
  loop: start=0, step=1, limit=4
  $region2: #{_apply_mask_offset.1} parent=0 // loop_pre_header
    _
  $region3: #{_apply_mask_offset.1} parent=0 // loop_header
    %s9 = sphi 0, %s13
    %p10 = scmp.ge.s32.totalorder %s9, 4
    %s16 = sphi 0, %s28
    %s17 = sphi 0, %s24
    %s18 = sphi 0, %s16
    %s19 = sphi 0, %s17
    %s20 = sphi 0, %s18
    %s21 = sphi 0, %s19
    %s33 = sphi 0, %s35
    %s36 = sphi 0, %s33
    %s37 = sphi 0, %s36
    %s53 = sphi 0, %s37
    %s59 = sphi 0, %s61
    %s62 = sphi 0, %s59
    %s63 = sphi 0, %s62
    %s79 = sphi 0, %s63
    %s85 = sphi 0, %s87
    %s88 = sphi 0, %s85
    %s89 = sphi 0, %s88
    %s105 = sphi 0, %s89
    %s113 = sphi 0, %s115
    %s116 = sphi 0, %s113
    %s117 = sphi 0, %s116
    %s133 = sphi 0, %s117
  $region4: #{_apply_mask_offset.1} parent=0 // loop_header_branch
    %12 = sbr.rel (%p10) target = $region8
  $region5: #{_apply_mask_offset.1} parent=0 // loop_body
    %s14 = ssub.s32 %s9, 1
    %s15 = ssub.s32 %s9, 2
    %s22 = sadd.s32 1, %s17
    %p23 = scmp.ge.s32.totalorder %s22, 1
    %s24 = scalar_select %p23, 0, %s22
    %s25 = sadd.s32 1, %s16
    %s26 = scalar_select %p23, %s25, %s16
    %p27 = scmp.ge.s32.totalorder %s26, 2
    %s28 = scalar_select %p27, 0, %s26
    %s29 = ssub.s32 %s17, %s24
    %s30 = ssub.s32 %s16, %s28
    %s31 = sor.u32 %s29, %s30
    %p32 = scmp.eq.s32.totalorder %s31, 0
    %s34 = sadd.s32 %s33, 1
    %s35 = scalar_select %p32, %s33, %s34
    %p38 = pneg %p32
    %p39 = scmp.eq.s32.totalorder %s9, 1
    %p40 = por %p38, %p39
    %p41 = scmp.ne.s32.totalorder %s33, %s36
    %p42 = scmp.eq.s32.totalorder %s9, 0
    %p43 = por %p41, %p42
    %p44 = scmp.ne.s32.totalorder %s33, %s36
    %p45 = scmp.eq.s32.totalorder %s14, 1
    %p46 = por %p44, %p45
    %p47 = scmp.ne.s32.totalorder %s36, %s37
    %p48 = scmp.eq.s32.totalorder %s14, 0
    %p49 = por %p47, %p48
    %p50 = scmp.ne.s32.totalorder %s36, %s37
    %p51 = scmp.eq.s32.totalorder %s15, 1
    %p52 = por %p50, %p51
    %p54 = scmp.ne.s32.totalorder %s37, %s53
    %p55 = scmp.eq.s32.totalorder %s15, 0
    %p56 = por %p54, %p55
    %s57 = ssub.s32 %s16, %s28
    %p58 = scmp.eq.s32.totalorder %s57, 0
    %s60 = sadd.s32 %s59, 1
    %s61 = scalar_select %p58, %s59, %s60
    %p64 = pneg %p58
    %p65 = scmp.eq.s32.totalorder %s9, 1
    %p66 = por %p64, %p65
    %p67 = scmp.ne.s32.totalorder %s59, %s62
    %p68 = scmp.eq.s32.totalorder %s9, 0
    %p69 = por %p67, %p68
    %p70 = scmp.ne.s32.totalorder %s59, %s62
    %p71 = scmp.eq.s32.totalorder %s14, 1
    %p72 = por %p70, %p71
    %p73 = scmp.ne.s32.totalorder %s62, %s63
    %p74 = scmp.eq.s32.totalorder %s14, 0
    %p75 = por %p73, %p74
    %p76 = scmp.ne.s32.totalorder %s62, %s63
    %p77 = scmp.eq.s32.totalorder %s15, 1
    %p78 = por %p76, %p77
    %p80 = scmp.ne.s32.totalorder %s63, %s79
    %p81 = scmp.eq.s32.totalorder %s15, 0
    %p82 = por %p80, %p81
    %s83 = ssub.s32 %s16, %s28
    %p84 = scmp.eq.s32.totalorder %s83, 0
    %s86 = sadd.s32 %s85, 1
    %s87 = scalar_select %p84, %s85, %s86
    %p90 = pneg %p84
    %p91 = scmp.eq.s32.totalorder %s9, 1
    %p92 = por %p90, %p91
    %p93 = scmp.ne.s32.totalorder %s85, %s88
    %p94 = scmp.eq.s32.totalorder %s9, 0
    %p95 = por %p93, %p94
    %p96 = scmp.ne.s32.totalorder %s85, %s88
    %p97 = scmp.eq.s32.totalorder %s14, 1
    %p98 = por %p96, %p97
    %p99 = scmp.ne.s32.totalorder %s88, %s89
    %p100 = scmp.eq.s32.totalorder %s14, 0
    %p101 = por %p99, %p100
    %p102 = scmp.ne.s32.totalorder %s88, %s89
    %p103 = scmp.eq.s32.totalorder %s15, 1
    %p104 = por %p102, %p103
    %p106 = scmp.ne.s32.totalorder %s89, %s105
    %p107 = scmp.eq.s32.totalorder %s15, 0
    %p108 = por %p106, %p107
    %s109 = ssub.s32 %s17, %s24
    %s110 = ssub.s32 %s16, %s28
    %s111 = sor.u32 %s109, %s110
    %p112 = scmp.eq.s32.totalorder %s111, 0
    %s114 = sadd.s32 %s113, 1
    %s115 = scalar_select %p112, %s113, %s114
    %p118 = pneg %p112
    %p119 = scmp.eq.s32.totalorder %s9, 1
    %p120 = por %p118, %p119
    %p121 = scmp.ne.s32.totalorder %s113, %s116
    %p122 = scmp.eq.s32.totalorder %s9, 0
    %p123 = por %p121, %p122
    %p124 = scmp.ne.s32.totalorder %s113, %s116
    %p125 = scmp.eq.s32.totalorder %s14, 1
    %p126 = por %p124, %p125
    %p127 = scmp.ne.s32.totalorder %s116, %s117
    %p128 = scmp.eq.s32.totalorder %s14, 0
    %p129 = por %p127, %p128
    %p130 = scmp.ne.s32.totalorder %s116, %s117
    %p131 = scmp.eq.s32.totalorder %s15, 1
    %p132 = por %p130, %p131
    %p134 = scmp.ne.s32.totalorder %s117, %s133
    %p135 = scmp.eq.s32.totalorder %s15, 0
    %p136 = por %p134, %p135
    %p137 = scmp.le.s32.totalorder 1, %s9
    %p138 = scmp.lt.s32.totalorder %s9, 3
    %p139 = pnand %p137, %p138
    %p140 = pneg %p139
    // Predicated region
    $region9: #{_apply_mask_offset.1} parent=5 // pred_check
      _
    $region10: #{_apply_mask_offset.1} parent=5 // pred_check_branch
      %142 = sbr.rel (%p139) target = $region12
    $region11: #{_apply_mask_offset.1} parent=5 // pred_region
      %s143 = ssub.s32 %s9, 1
    $region12: #{_apply_mask_offset.1} parent=5 // pred_fallthru
      _
    %p144 = scmp.lt.s32.totalorder %s9, 2
    // Predicated region
    $region13: #{_apply_mask_offset.1} parent=5 // pred_check
      %p145 = pneg %p144
    $region14: #{_apply_mask_offset.1} parent=5 // pred_check_branch
      %147 = sbr.rel (%p145) target = $region16
    $region15: #{_apply_mask_offset.1} parent=5 // pred_region
      // Predicated region
      $region17: #{_apply_mask_offset.1} parent=15 // pred_check
        %p148 = pneg %p43
      $region18: #{_apply_mask_offset.1} parent=15 // pred_check_branch
        %150 = sbr.rel (%p148) target = $region20
      $region19: #{_apply_mask_offset.1} parent=15 // pred_region
        %p151 = scmp.lt.s32.totalorder %s17, 0
        %s152 = scalar_select %p151, %s17, 0
        %p153 = scmp.lt.s32.totalorder %s16, 1
        %s154 = scalar_select %p153, %s16, 1
        %s155 = smul.addr %s152, 2
        %s156 = sadd.s32 %s154, %s155
        %s157 = smul.addr %s156, 8
        %s158 = scalar_lea.vmem %s0, %s157
      $region20: #{_apply_mask_offset.1} parent=15 // pred_fallthru
        _
      // Predicated region
      $region21: #{_apply_mask_offset.1} parent=15 // pred_check
        %p159 = pneg %p69
      $region22: #{_apply_mask_offset.1} parent=15 // pred_check_branch
        %161 = sbr.rel (%p159) target = $region24
      $region23: #{_apply_mask_offset.1} parent=15 // pred_region
        %p162 = scmp.lt.s32.totalorder %s16, 1
        %s163 = scalar_select %p162, %s16, 1
        %s164 = scalar_lea.vmem %s1, %s163
      $region24: #{_apply_mask_offset.1} parent=15 // pred_fallthru
        _
      // Predicated region
      $region25: #{_apply_mask_offset.1} parent=15 // pred_check
        %p165 = pneg %p95
      $region26: #{_apply_mask_offset.1} parent=15 // pred_check_branch
        %167 = sbr.rel (%p165) target = $region28
      $region27: #{_apply_mask_offset.1} parent=15 // pred_region
        %p168 = scmp.lt.s32.totalorder %s16, 1
        %s169 = scalar_select %p168, %s16, 1
        %s170 = scalar_lea.vmem %s2, %s169
      $region28: #{_apply_mask_offset.1} parent=15 // pred_fallthru
        _
    $region16: #{_apply_mask_offset.1} parent=5 // pred_fallthru
      _
    %p171 = scmp.le.s32.totalorder 1, %s9
    %p172 = scmp.lt.s32.totalorder %s9, 3
    %p173 = pnand %p171, %p172
    %p174 = pneg %p173
    // Predicated region
    $region29: #{_apply_mask_offset.1} parent=5 // pred_check
      _
    $region30: #{_apply_mask_offset.1} parent=5 // pred_check_branch
      %176 = sbr.rel (%p173) target = $region32
    $region31: #{_apply_mask_offset.1} parent=5 // pred_region
      %s177 = ssub.s32 %s9, 1
      %p178 = scmp.lt.s32.totalorder %s19, 0
      %s179 = scalar_select %p178, %s19, 0
      %p180 = scmp.lt.s32.totalorder %s18, 1
      %s181 = scalar_select %p180, %s18, 1
      %s182 = smul.addr %s179, 2
      %s183 = sadd.s32 %s181, %s182
      %s184 = smul.addr %s183, 8
      %s185 = scalar_lea.vmem %s0, %s184
      %p186 = pneg %p49
      %p187 = pneg %p46
      %p188 = scmp.lt.s32.totalorder %s18, 1
      %s189 = scalar_select %p188, %s18, 1
      %s190 = scalar_lea.vmem %s1, %s189
      %p191 = pneg %p75
      %p192 = pneg %p72
      %p193 = scmp.lt.s32.totalorder %s18, 1
      %s194 = scalar_select %p193, %s18, 1
      %s195 = scalar_lea.vmem %s2, %s194
      %p196 = pneg %p101
      %p197 = pneg %p98
      %p198 = pneg %p129
      %p199 = pneg %p126
      %p200 = scmp.lt.s32.totalorder %s19, 0
      %s201 = scalar_select %p200, %s19, 0
      %p202 = scmp.lt.s32.totalorder %s18, 1
      %s203 = scalar_select %p202, %s18, 1
      %s204 = smul.addr %s201, 2
      %s205 = sadd.s32 %s203, %s204
      %s206 = smul.addr %s205, 8
      %s207 = scalar_lea.vmem %s3, %s206
      %p208 = scmp.lt.s32.totalorder %s19, 0
      %s209 = scalar_select %p208, %s19, 0
      %p210 = scmp.lt.s32.totalorder %s18, 1
      %s211 = scalar_select %p210, %s18, 1
      %s212 = smul.addr %s209, 2
      %s213 = sadd.s32 %s211, %s212
      %s214 = smul.addr %s213, 8
      %s215 = scalar_lea.vmem %s0, %s214
      %p216 = scmp.lt.s32.totalorder %s18, 1
      %s217 = scalar_select %p216, %s18, 1
      %s218 = scalar_lea.vmem %s1, %s217
      %p219 = scmp.lt.s32.totalorder %s18, 1
      %s220 = scalar_select %p219, %s18, 1
      %s221 = scalar_lea.vmem %s2, %s220
      %p222 = scmp.lt.s32.totalorder %s19, 0
      %s223 = scalar_select %p222, %s19, 0
      %p224 = scmp.lt.s32.totalorder %s18, 1
      %s225 = scalar_select %p224, %s18, 1
      %s226 = smul.addr %s223, 2
      %s227 = sadd.s32 %s225, %s226
      %s228 = smul.addr %s227, 8
      %s229 = scalar_lea.vmem %s3, %s228
      %v230 = vld [vmem:[%s215] sm:$0xff]
      %v231 = vld [vmem:[%s218] sm:$0x1]
      %v233 = vlaneseq
      %v234 = vshrl.u32 %v233, 7
      %v235 = vsub.s32 0, %v234
      %v236 = vrot.slane %v231, %v235
      %v238 = vmul.f32 %v230, %v236
      %v239 = vld [vmem:[%s221] sm:$0x1]
      %v241 = vlaneseq
      %v242 = vshrl.u32 %v241, 7
      %v243 = vsub.s32 0, %v242
      %v244 = vrot.slane %v239, %v243
      %v246 = vadd.f32 %v238, %v244
      %247 = vst [vmem:[%s229] sm:$0xff] %v246
      %p248 = scmp.lt.s32.totalorder %s19, 0
      %s249 = scalar_select %p248, %s19, 0
      %p250 = scmp.lt.s32.totalorder %s18, 1
      %s251 = scalar_select %p250, %s18, 1
      %s252 = smul.addr %s249, 2
      %s253 = sadd.s32 %s251, %s252
      %s254 = smul.addr %s253, 8
      %s255 = scalar_lea.vmem %s3, %s254
      // Predicated region
      $region33: #{_apply_mask_offset.1} parent=31 // pred_check
        %p256 = pneg %p126
      $region34: #{_apply_mask_offset.1} parent=31 // pred_check_branch
        %258 = sbr.rel (%p256) target = $region36
      $region35: #{_apply_mask_offset.1} parent=31 // pred_region
        _
      $region36: #{_apply_mask_offset.1} parent=31 // pred_fallthru
        _
    $region32: #{_apply_mask_offset.1} parent=5 // pred_fallthru
      _
    %p259 = scmp.le.s32.totalorder 2, %s9
    // Predicated region
    $region37: #{_apply_mask_offset.1} parent=5 // pred_check
      %p260 = pneg %p259
    $region38: #{_apply_mask_offset.1} parent=5 // pred_check_branch
      %262 = sbr.rel (%p260) target = $region40
    $region39: #{_apply_mask_offset.1} parent=5 // pred_region
      %s263 = ssub.s32 %s9, 2
      // Predicated region
      $region41: #{_apply_mask_offset.1} parent=39 // pred_check
        %p264 = pneg %p132
      $region42: #{_apply_mask_offset.1} parent=39 // pred_check_branch
        %266 = sbr.rel (%p264) target = $region44
      $region43: #{_apply_mask_offset.1} parent=39 // pred_region
        %p267 = scmp.lt.s32.totalorder %s21, 0
        %s268 = scalar_select %p267, %s21, 0
        %p269 = scmp.lt.s32.totalorder %s20, 1
        %s270 = scalar_select %p269, %s20, 1
        %s271 = smul.addr %s268, 2
        %s272 = sadd.s32 %s270, %s271
        %s273 = smul.addr %s272, 8
        %s274 = scalar_lea.vmem %s3, %s273
      $region44: #{_apply_mask_offset.1} parent=39 // pred_fallthru
        _
    $region40: #{_apply_mask_offset.1} parent=5 // pred_fallthru
      _
  $region6: #{_apply_mask_offset.1} parent=0 // loop_footer
    %s13 = sadd.s32 1, %s9
  $region7: #{_apply_mask_offset.1} parent=0 // loop_footer_branch
    %8 = sbr.rel target = $region3
  $region8: #{_apply_mask_offset.1} parent=0 // loop_exit
    _

</llo_original>
